<compile_context>
chip_gen: v5e
topology: v5e:2x2
jax: 0.10.0
libtpu: 0.0.40
codegen_flags: <defaults>
</compile_context>

<pallas_src>
import functools

import jax
import jax.numpy as jnp
from jax.experimental import pallas as pl
from jax.experimental.pallas import tpu as pltpu

_LANE = 128
_MIB = 1024 * 1024


def _tpu_vmem_bytes():
    try:
        return int(pltpu.get_tpu_info().vmem_capacity_bytes)
    except Exception:
        return 128 * _MIB  # v5e / v6e physical VMEM fallback


def _make_kernel(kt, kps, f128, tfc, ragged, overflow):
    """Grid point (sp, i, j, b, k): split sp / student i / teacher j /
    batch-block b / feature-chunk k (global chunk index c = sp*kps + k).

    s_ref, f_ref : (bsz_t, tfc, 128) feature chunk (leading dims squeezed)
    out_ref      : (bsz_t, 128)      lane-wise partial sums of (s-f)^2,
                                     resident across the k (reduction) axis.
    """

    def kernel(s_ref, f_ref, out_ref):
        sp = pl.program_id(0)
        k = pl.program_id(4)

        @pl.when(k == 0)
        def _():
            out_ref[...] = jnp.zeros_like(out_ref)

        def accum(mask_tail):
            d = s_ref[...].astype(jnp.float32) - f_ref[...].astype(jnp.float32)
            if mask_tail:
                # Last chunk is ragged: rows >= rem are out-of-bounds garbage.
                rem = f128 - (kt - 1) * tfc  # static
                row = jax.lax.broadcasted_iota(jnp.int32, d.shape, 1)
                d = jnp.where(row < rem, d, 0.0)
            out_ref[...] += jnp.sum(d * d, axis=1)

        if ragged or overflow:
            c = sp * kps + k
            @pl.when(c < kt - 1)
            def _():
                accum(False)

            @pl.when(c == kt - 1)
            def _():
                accum(ragged)
            # c >= kt (only when kt is odd under the 2-way split): skip — the
            # index_map clamped the DMA to a valid block, we just ignore it.
        else:
            accum(False)

    return kernel


@functools.partial(jax.jit, static_argnames=("target_block_bytes",))
def semckd_loss(s_value, f_target, weight, *, target_block_bytes=None):
    """s_value, f_target : (num_stu, num_tea, bsz, F) float32 or bfloat16
       weight            : (bsz, num_stu, num_tea)  float
    Returns the scalar SemCKD loss (matches the PyTorch forward)."""
    num_stu, num_tea, bsz, feat = s_value.shape
    itemsize = jnp.dtype(s_value.dtype).itemsize
    pack = {4: 8, 2: 16, 1: 32}.get(itemsize, 8)  # sublane packing per dtype

    # ---- per-input block budget & scoped-VMEM limit, per generation --------
    vmem = _tpu_vmem_bytes()
    blk = (target_block_bytes if target_block_bytes
           else min(8 * _MIB, max(2 * _MIB, vmem // 8)))
    vmem_limit = int(min(vmem * 5 // 8, 48 * _MIB))  # 2 in x 2 buf x blk fits

    # ---- lane-dense layout (pad only up to the 128-lane boundary) ----------
    f128 = pl.cdiv(feat, _LANE)
    feat128 = f128 * _LANE
    if feat128 != feat:
        # TODO(synk): this pad is a full copy of both tensors; it only
        # triggers when C*H*W is not a multiple of 128.
        pad = ((0, 0), (0, 0), (0, 0), (0, feat128 - feat))
        s_value = jnp.pad(s_value, pad)
        f_target = jnp.pad(f_target, pad)
    s5 = s_value.reshape(num_stu, num_tea, bsz, f128, _LANE)
    f5 = f_target.reshape(num_stu, num_tea, bsz, f128, _LANE)

    # ---- batch tiling: cap the per-block batch extent -----------------------
    max_bt = max(8, (blk // (pack * _LANE * itemsize)) // 8 * 8)
    if bsz <= max_bt:
        bsz_t, nb = bsz, 1
    else:
        bsz_t, nb = max_bt, pl.cdiv(bsz, max_bt)

    # ---- feature-chunk tiling, sized by dtype to ~blk bytes per input block -
    rows = max(pack, blk // (bsz_t * _LANE * itemsize))
    tfc = max(pack, (rows // pack) * pack)
    if tfc >= f128:
        tfc = f128
    kt = pl.cdiv(f128, tfc)
    ragged = (f128 % tfc) != 0          # last chunk masked in-kernel

    # ---- optional 2-way megacore split of the reduction axis (v7x) ----------
    n_split = 2 if (num_stu * num_tea * nb == 1 and kt >= 2) else 1
    kps = pl.cdiv(kt, n_split)
    overflow = (n_split * kps) != kt    # odd kt: one extra (skipped) step

    def in_map(sp, i, j, b, k):
        c = sp * kps + k
        if overflow:
            c = jnp.minimum(c, kt - 1)  # keep the DMA in bounds; kernel skips
        return (i, j, b, c, 0)

    feat_spec = pl.BlockSpec((None, None, bsz_t, tfc, _LANE), in_map)
    out_spec = pl.BlockSpec((None, None, None, bsz_t, _LANE),
                            lambda sp, i, j, b, k: (sp, i, j, b, 0))

    partial = pl.pallas_call(
        _make_kernel(kt, kps, f128, tfc, ragged, overflow),
        out_shape=jax.ShapeDtypeStruct(
            (n_split, num_stu, num_tea, bsz, _LANE), jnp.float32),
        grid=(n_split, num_stu, num_tea, nb, kps),
        in_specs=[feat_spec, feat_spec],
        out_specs=out_spec,
        compiler_params=pltpu.CompilerParams(
            dimension_semantics=("parallel", "parallel", "parallel",
                                 "parallel", "arbitrary"),
            vmem_limit_bytes=vmem_limit),
    )(s5, f5)

    # ---- tiny epilogue in plain JAX -----------------------------------------
    ind_loss = jnp.sum(partial, axis=(0, -1)) / float(feat)   # (NS, NT, bsz)
    ind_loss = jnp.transpose(ind_loss, (2, 0, 1))              # (bsz, NS, NT)
    return jnp.sum(weight.astype(jnp.float32) * ind_loss) / (1.0 * bsz * num_stu)


def semckd_loss_ref(s_value, f_target, weight):
    """Pure-JAX reference matching the PyTorch forward."""
    ind_loss = jnp.mean((s_value - f_target) ** 2, axis=-1)   # (NS, NT, bsz)
    ind_loss = jnp.transpose(ind_loss, (2, 0, 1))             # (bsz, NS, NT)
    bsz, num_stu, _ = weight.shape
    return jnp.sum(weight * ind_loss) / (1.0 * bsz * num_stu)


if __name__ == "__main__":
    key = jax.random.PRNGKey(0)
    bsz, num_stu, num_tea = 2, 2, 3
    C, H, W = 4, 16, 16
    F = C * H * W

    k1, k2, k3 = jax.random.split(key, 3)
    # NCHW feature maps for every (student, teacher) pair, flattened to F.
    s_value = jax.random.normal(
        k1, (num_stu, num_tea, bsz, C, H, W), jnp.float32).reshape(
        num_stu, num_tea, bsz, F)
    f_target = jax.random.normal(
        k2, (num_stu, num_tea, bsz, C, H, W), jnp.float32).reshape(
        num_stu, num_tea, bsz, F)
    weight = jax.nn.softmax(
        jax.random.normal(k3, (bsz, num_stu, num_tea), jnp.float32), axis=-1)

    # 1) f32 inputs, single-chunk fast path.
    loss = jax.block_until_ready(semckd_loss(s_value, f_target, weight))
    ref = semckd_loss_ref(s_value, f_target, weight)
    assert jnp.allclose(loss, ref, rtol=1e-5, atol=1e-5), (loss, ref)

    # 2) bf16 inputs (halved HBM traffic; kernel still accumulates in f32).
    s_bf = s_value.astype(jnp.bfloat16)
    f_bf = f_target.astype(jnp.bfloat16)
    loss_bf = jax.block_until_ready(semckd_loss(s_bf, f_bf, weight))
    ref_bf = semckd_loss_ref(s_bf.astype(jnp.float32),
                             f_bf.astype(jnp.float32), weight)
    assert jnp.allclose(loss_bf, ref_bf, rtol=2e-2, atol=1e-2), (loss_bf, ref_bf)

    # 3) Single (student, teacher) pair with F not a multiple of 128 and a tiny
    #    block override: exercises the 128-lane pad, the in-kernel ragged-chunk
    #    mask, and the 2-way megacore split (with odd-chunk skip).
    F3 = 2500
    s3 = jax.random.normal(k1, (1, 1, bsz, F3), jnp.float32)
    f3 = jax.random.normal(k2, (1, 1, bsz, F3), jnp.float32)
    w3 = jax.nn.softmax(
        jax.random.normal(k3, (bsz, 1, 1), jnp.float32), axis=-1)
    loss3 = jax.block_until_ready(
        semckd_loss(s3, f3, w3, target_block_bytes=4096))
    ref3 = semckd_loss_ref(s3, f3, w3)
    assert jnp.allclose(loss3, ref3, rtol=1e-5, atol=1e-5), (loss3, ref3)

    print("KERNEL_OK")
</pallas_src>

<mosaic_0001>
module attributes {stable_mosaic.version = 11 : i64} {
  func.func @kernel(%arg0: i32, %arg1: i32, %arg2: i32, %arg3: i32, %arg4: i32, %arg5: memref<1x1x2x8x128xf32, #tpu.memory_space<vmem>>, %arg6: memref<1x1x2x8x128xf32, #tpu.memory_space<vmem>>, %arg7: memref<1x1x1x2x128xf32, #tpu.memory_space<vmem>>) attributes {dimension_semantics = [#tpu.dimension_semantics<parallel>, #tpu.dimension_semantics<parallel>, #tpu.dimension_semantics<parallel>, #tpu.dimension_semantics<parallel>, #tpu.dimension_semantics<arbitrary>], iteration_bounds = array<i64: 1, 2, 3, 1, 1>, scalar_prefetch = 0 : i64, scratch_operands = 0 : i64, tpu.core_type = #tpu.core_type<tc>, window_params = [{transform_indices = @transform_0, window_bounds = array<i64: 1, 1, 2, 8, 128>}, {transform_indices = @transform_1, window_bounds = array<i64: 1, 1, 2, 8, 128>}, {transform_indices = @transform_2, window_bounds = array<i64: 1, 1, 1, 2, 128>}]} {
    %c0_i32 = arith.constant 0 : i32
    %0 = arith.cmpi eq, %arg4, %c0_i32 : i32
    %1 = arith.extui %0 : i1 to i32
    %c0_i32_0 = arith.constant 0 : i32
    %2 = arith.cmpi ne, %1, %c0_i32_0 : i32
    scf.if %2 {
      %cst_20 = arith.constant 0.000000e+00 : f32
      %16 = vector.broadcast %cst_20 : f32 to vector<2x128xf32>
      %c0_21 = arith.constant 0 : index
      %c0_22 = arith.constant 0 : index
      %c0_23 = arith.constant 0 : index
      %c0_24 = arith.constant 0 : index
      %c0_25 = arith.constant 0 : index
      %17 = vector.load %arg7[%c0_21, %c0_22, %c0_23, %c0_24, %c0_25] : memref<1x1x1x2x128xf32, #tpu.memory_space<vmem>>, vector<1x1x1x2x128xf32>
      %18 = vector.shape_cast %17 : vector<1x1x1x2x128xf32> to vector<2x128xf32>
      %19 = vector.shape_cast %16 : vector<2x128xf32> to vector<1x1x1x2x128xf32>
      tpu.vector_store %arg7[%c0_21, %c0_22, %c0_23, %c0_24, %c0_25], %19 {strides = array<i32>} : memref<1x1x1x2x128xf32, #tpu.memory_space<vmem>>, vector<1x1x1x2x128xf32>,
    } else {
    }
    %c0 = arith.constant 0 : index
    %c0_1 = arith.constant 0 : index
    %c0_2 = arith.constant 0 : index
    %c0_3 = arith.constant 0 : index
    %c0_4 = arith.constant 0 : index
    %3 = vector.load %arg5[%c0, %c0_1, %c0_2, %c0_3, %c0_4] : memref<1x1x2x8x128xf32, #tpu.memory_space<vmem>>, vector<1x1x2x8x128xf32>
    %4 = vector.shape_cast %3 : vector<1x1x2x8x128xf32> to vector<2x8x128xf32>
    %c0_5 = arith.constant 0 : index
    %c0_6 = arith.constant 0 : index
    %c0_7 = arith.constant 0 : index
    %c0_8 = arith.constant 0 : index
    %c0_9 = arith.constant 0 : index
    %5 = vector.load %arg6[%c0_5, %c0_6, %c0_7, %c0_8, %c0_9] : memref<1x1x2x8x128xf32, #tpu.memory_space<vmem>>, vector<1x1x2x8x128xf32>
    %6 = vector.shape_cast %5 : vector<1x1x2x8x128xf32> to vector<2x8x128xf32>
    %7 = arith.subf %4, %6 : vector<2x8x128xf32>
    %c0_10 = arith.constant 0 : index
    %c0_11 = arith.constant 0 : index
    %c0_12 = arith.constant 0 : index
    %c0_13 = arith.constant 0 : index
    %c0_14 = arith.constant 0 : index
    %8 = vector.load %arg7[%c0_10, %c0_11, %c0_12, %c0_13, %c0_14] : memref<1x1x1x2x128xf32, #tpu.memory_space<vmem>>, vector<1x1x1x2x128xf32>
    %9 = vector.shape_cast %8 : vector<1x1x1x2x128xf32> to vector<2x128xf32>
    %10 = arith.mulf %7, %7 : vector<2x8x128xf32>
    %cst = arith.constant dense<0.000000e+00> : vector<2x128xf32>
    %11 = vector.multi_reduction <add>, %10, %cst [1] : vector<2x8x128xf32> to vector<2x128xf32>
    %12 = arith.addf %9, %11 : vector<2x128xf32>
    %c0_15 = arith.constant 0 : index
    %c0_16 = arith.constant 0 : index
    %c0_17 = arith.constant 0 : index
    %c0_18 = arith.constant 0 : index
    %c0_19 = arith.constant 0 : index
    %13 = vector.load %arg7[%c0_15, %c0_16, %c0_17, %c0_18, %c0_19] : memref<1x1x1x2x128xf32, #tpu.memory_space<vmem>>, vector<1x1x1x2x128xf32>
    %14 = vector.shape_cast %13 : vector<1x1x1x2x128xf32> to vector<2x128xf32>
    %15 = vector.shape_cast %12 : vector<2x128xf32> to vector<1x1x1x2x128xf32>
    tpu.vector_store %arg7[%c0_15, %c0_16, %c0_17, %c0_18, %c0_19], %15 {strides = array<i32>} : memref<1x1x1x2x128xf32, #tpu.memory_space<vmem>>, vector<1x1x1x2x128xf32>,
    return
  }
  func.func @transform_0(%arg0: i32, %arg1: i32, %arg2: i32, %arg3: i32, %arg4: i32) -> (i32, i32, i32, i32, i32) {
    %c1_i32 = arith.constant 1 : i32
    %0 = arith.muli %arg0, %c1_i32 : i32
    %1 = arith.addi %0, %arg4 : i32
    %c0_i32 = arith.constant 0 : i32
    %c0_i32_0 = arith.constant 0 : i32
    return %arg1, %arg2, %arg3, %1, %c0_i32 : i32, i32, i32, i32, i32
  }
  func.func @transform_1(%arg0: i32, %arg1: i32, %arg2: i32, %arg3: i32, %arg4: i32) -> (i32, i32, i32, i32, i32) {
    %c1_i32 = arith.constant 1 : i32
    %0 = arith.muli %arg0, %c1_i32 : i32
    %1 = arith.addi %0, %arg4 : i32
    %c0_i32 = arith.constant 0 : i32
    %c0_i32_0 = arith.constant 0 : i32
    return %arg1, %arg2, %arg3, %1, %c0_i32 : i32, i32, i32, i32, i32
  }
  func.func @transform_2(%arg0: i32, %arg1: i32, %arg2: i32, %arg3: i32, %arg4: i32) -> (i32, i32, i32, i32, i32) {
    %c0_i32 = arith.constant 0 : i32
    %c0_i32_0 = arith.constant 0 : i32
    return %arg0, %arg1, %arg2, %arg3, %c0_i32 : i32, i32, i32, i32, i32
  }
}

</mosaic_0001>

<llo_original>
// kernel: semckd_loss.1
$region0: #{semckd_loss.1}
  #allocation0 [shape = 'u32[]', space=smem, size = 0x4, offset = 0x4, fixed_abs, tag = 'smem constant byte address 0x4 - core index']
  #allocation1 [shape = 'u32[72,128]{1,0:T(1,128)}', space=vmem, size = 0x9000, scoped, tag = 'internal scratch']
  %s0 = inlined_call_operand.vmem [shape: f32[2,3,2,8,128], index: 0, kind: input, shape index: {}]
  %s1 = inlined_call_operand.vmem [shape: f32[2,3,2,8,128], index: 1, kind: input, shape index: {}]
  %s2 = inlined_call_operand.vmem [shape: f32[1,2,3,2,128], index: 2, kind: output, shape index: {}]
  %s3 = sld [smem:[#allocation0]]
  $region45: #{semckd_loss.1} parent=0
    _
  %s5 = ssub.s32 1, %s3
  %s6 = scalar_select 0, %s5, %s3
  loop: start=0, step=1, limit=8
  $region2: #{semckd_loss.1} parent=0 // loop_pre_header
    _
  $region3: #{semckd_loss.1} parent=0 // loop_header
    %s8 = sphi 0, %s12
    %p9 = scmp.ge.s32.totalorder %s8, 8
    %s15 = sphi 0, %s48
    %s16 = sphi 0, %s44
    %s17 = sphi 0, %s40
    %s18 = sphi 0, %s36
    %s19 = sphi 0, %s32
    %s20 = sphi 0, %s15
    %s21 = sphi 0, %s16
    %s22 = sphi 0, %s17
    %s23 = sphi 0, %s18
    %s24 = sphi 0, %s19
    %s25 = sphi 0, %s20
    %s26 = sphi 0, %s21
    %s27 = sphi 0, %s22
    %s28 = sphi 0, %s23
    %s29 = sphi 0, %s24
    %s59 = sphi 0, %s61
    %s62 = sphi 0, %s59
    %s63 = sphi 0, %s62
    %s79 = sphi 0, %s63
    %s93 = sphi 0, %s95
    %s96 = sphi 0, %s93
    %s97 = sphi 0, %s96
    %s113 = sphi 0, %s97
    %s125 = sphi 0, %s127
    %s128 = sphi 0, %s125
    %s129 = sphi 0, %s128
    %s145 = sphi 0, %s129
  $region4: #{semckd_loss.1} parent=0 // loop_header_branch
    %11 = sbr.rel (%p9) target = $region8
  $region5: #{semckd_loss.1} parent=0 // loop_body
    %s13 = ssub.s32 %s8, 1
    %s14 = ssub.s32 %s8, 2
    %s30 = sadd.s32 1, %s19
    %p31 = scmp.ge.s32.totalorder %s30, 1
    %s32 = scalar_select %p31, 0, %s30
    %s33 = sadd.s32 1, %s18
    %s34 = scalar_select %p31, %s33, %s18
    %p35 = scmp.ge.s32.totalorder %s34, 1
    %s36 = scalar_select %p35, 0, %s34
    %s37 = sadd.s32 1, %s17
    %s38 = scalar_select %p35, %s37, %s17
    %p39 = scmp.ge.s32.totalorder %s38, 3
    %s40 = scalar_select %p39, 0, %s38
    %s41 = sadd.s32 1, %s16
    %s42 = scalar_select %p39, %s41, %s16
    %p43 = scmp.ge.s32.totalorder %s42, 2
    %s44 = scalar_select %p43, 0, %s42
    %s45 = sadd.s32 1, %s15
    %s46 = scalar_select %p43, %s45, %s15
    %p47 = scmp.ge.s32.totalorder %s46, 1
    %s48 = scalar_select %p47, 0, %s46
    %s49 = sadd.s32 %s15, %s19
    %s50 = sadd.s32 %s48, %s32
    %s51 = ssub.s32 %s16, %s44
    %s52 = ssub.s32 %s17, %s40
    %s53 = sor.u32 %s51, %s52
    %s54 = ssub.s32 %s18, %s36
    %s55 = sor.u32 %s53, %s54
    %s56 = ssub.s32 %s49, %s50
    %s57 = sor.u32 %s55, %s56
    %p58 = scmp.eq.s32.totalorder %s57, 0
    %s60 = sadd.s32 %s59, 1
    %s61 = scalar_select %p58, %s59, %s60
    %p64 = pneg %p58
    %p65 = scmp.eq.s32.totalorder %s8, 5
    %p66 = por %p64, %p65
    %p67 = scmp.ne.s32.totalorder %s59, %s62
    %p68 = scmp.eq.s32.totalorder %s8, 0
    %p69 = por %p67, %p68
    %p70 = scmp.ne.s32.totalorder %s59, %s62
    %p71 = scmp.eq.s32.totalorder %s13, 5
    %p72 = por %p70, %p71
    %p73 = scmp.ne.s32.totalorder %s62, %s63
    %p74 = scmp.eq.s32.totalorder %s13, 0
    %p75 = por %p73, %p74
    %p76 = scmp.ne.s32.totalorder %s62, %s63
    %p77 = scmp.eq.s32.totalorder %s14, 5
    %p78 = por %p76, %p77
    %p80 = scmp.ne.s32.totalorder %s63, %s79
    %p81 = scmp.eq.s32.totalorder %s14, 0
    %p82 = por %p80, %p81
    %s83 = sadd.s32 %s15, %s19
    %s84 = sadd.s32 %s48, %s32
    %s85 = ssub.s32 %s16, %s44
    %s86 = ssub.s32 %s17, %s40
    %s87 = sor.u32 %s85, %s86
    %s88 = ssub.s32 %s18, %s36
    %s89 = sor.u32 %s87, %s88
    %s90 = ssub.s32 %s83, %s84
    %s91 = sor.u32 %s89, %s90
    %p92 = scmp.eq.s32.totalorder %s91, 0
    %s94 = sadd.s32 %s93, 1
    %s95 = scalar_select %p92, %s93, %s94
    %p98 = pneg %p92
    %p99 = scmp.eq.s32.totalorder %s8, 5
    %p100 = por %p98, %p99
    %p101 = scmp.ne.s32.totalorder %s93, %s96
    %p102 = scmp.eq.s32.totalorder %s8, 0
    %p103 = por %p101, %p102
    %p104 = scmp.ne.s32.totalorder %s93, %s96
    %p105 = scmp.eq.s32.totalorder %s13, 5
    %p106 = por %p104, %p105
    %p107 = scmp.ne.s32.totalorder %s96, %s97
    %p108 = scmp.eq.s32.totalorder %s13, 0
    %p109 = por %p107, %p108
    %p110 = scmp.ne.s32.totalorder %s96, %s97
    %p111 = scmp.eq.s32.totalorder %s14, 5
    %p112 = por %p110, %p111
    %p114 = scmp.ne.s32.totalorder %s97, %s113
    %p115 = scmp.eq.s32.totalorder %s14, 0
    %p116 = por %p114, %p115
    %s117 = ssub.s32 %s15, %s48
    %s118 = ssub.s32 %s16, %s44
    %s119 = sor.u32 %s117, %s118
    %s120 = ssub.s32 %s17, %s40
    %s121 = sor.u32 %s119, %s120
    %s122 = ssub.s32 %s18, %s36
    %s123 = sor.u32 %s121, %s122
    %p124 = scmp.eq.s32.totalorder %s123, 0
    %s126 = sadd.s32 %s125, 1
    %s127 = scalar_select %p124, %s125, %s126
    %p130 = pneg %p124
    %p131 = scmp.eq.s32.totalorder %s8, 5
    %p132 = por %p130, %p131
    %p133 = scmp.ne.s32.totalorder %s125, %s128
    %p134 = scmp.eq.s32.totalorder %s8, 0
    %p135 = por %p133, %p134
    %p136 = scmp.ne.s32.totalorder %s125, %s128
    %p137 = scmp.eq.s32.totalorder %s13, 5
    %p138 = por %p136, %p137
    %p139 = scmp.ne.s32.totalorder %s128, %s129
    %p140 = scmp.eq.s32.totalorder %s13, 0
    %p141 = por %p139, %p140
    %p142 = scmp.ne.s32.totalorder %s128, %s129
    %p143 = scmp.eq.s32.totalorder %s14, 5
    %p144 = por %p142, %p143
    %p146 = scmp.ne.s32.totalorder %s129, %s145
    %p147 = scmp.eq.s32.totalorder %s14, 0
    %p148 = por %p146, %p147
    %p149 = scmp.le.s32.totalorder 1, %s8
    %p150 = scmp.lt.s32.totalorder %s8, 7
    %p151 = pnand %p149, %p150
    %p152 = pneg %p151
    // Predicated region
    $region9: #{semckd_loss.1} parent=5 // pred_check
      _
    $region10: #{semckd_loss.1} parent=5 // pred_check_branch
      %154 = sbr.rel (%p151) target = $region12
    $region11: #{semckd_loss.1} parent=5 // pred_region
      %s155 = ssub.s32 %s8, 1
    $region12: #{semckd_loss.1} parent=5 // pred_fallthru
      _
    %p156 = scmp.lt.s32.totalorder %s8, 6
    // Predicated region
    $region13: #{semckd_loss.1} parent=5 // pred_check
      %p157 = pneg %p156
    $region14: #{semckd_loss.1} parent=5 // pred_check_branch
      %159 = sbr.rel (%p157) target = $region16
    $region15: #{semckd_loss.1} parent=5 // pred_region
      // Predicated region
      $region17: #{semckd_loss.1} parent=15 // pred_check
        %p160 = pneg %p69
      $region18: #{semckd_loss.1} parent=15 // pred_check_branch
        %162 = sbr.rel (%p160) target = $region20
      $region19: #{semckd_loss.1} parent=15 // pred_region
        %s163 = sadd.s32 %s15, %s19
        %s164 = smul.u32 2, %s18
        %p165 = scmp.lt.s32.totalorder %s16, 1
        %s166 = scalar_select %p165, %s16, 1
        %p167 = scmp.lt.s32.totalorder %s17, 2
        %s168 = scalar_select %p167, %s17, 2
        %p169 = scmp.lt.s32.totalorder %s164, 1
        %s170 = scalar_select %p169, %s164, 1
        %p171 = scmp.lt.s32.totalorder %s163, 0
        %s172 = scalar_select %p171, %s163, 0
        %s173 = sadd.s32 %s172, %s170
        %s174 = smul.addr %s168, 2
        %s175 = sadd.s32 %s173, %s174
        %s176 = smul.addr %s166, 6
        %s177 = sadd.s32 %s175, %s176
        %s178 = smul.addr %s177, 8
        %s179 = scalar_lea.vmem %s0, %s178
        %s180 = sadd.s32 %s15, %s19
        %s181 = smul.u32 2, %s18
      $region20: #{semckd_loss.1} parent=15 // pred_fallthru
        _
      // Predicated region
      $region21: #{semckd_loss.1} parent=15 // pred_check
        %p182 = pneg %p103
      $region22: #{semckd_loss.1} parent=15 // pred_check_branch
        %184 = sbr.rel (%p182) target = $region24
      $region23: #{semckd_loss.1} parent=15 // pred_region
        %s185 = sadd.s32 %s15, %s19
        %s186 = smul.u32 2, %s18
        %p187 = scmp.lt.s32.totalorder %s16, 1
        %s188 = scalar_select %p187, %s16, 1
        %p189 = scmp.lt.s32.totalorder %s17, 2
        %s190 = scalar_select %p189, %s17, 2
        %p191 = scmp.lt.s32.totalorder %s186, 1
        %s192 = scalar_select %p191, %s186, 1
        %p193 = scmp.lt.s32.totalorder %s185, 0
        %s194 = scalar_select %p193, %s185, 0
        %s195 = sadd.s32 %s194, %s192
        %s196 = smul.addr %s190, 2
        %s197 = sadd.s32 %s195, %s196
        %s198 = smul.addr %s188, 6
        %s199 = sadd.s32 %s197, %s198
        %s200 = smul.addr %s199, 8
        %s201 = scalar_lea.vmem %s1, %s200
        %s202 = sadd.s32 %s15, %s19
        %s203 = smul.u32 2, %s18
      $region24: #{semckd_loss.1} parent=15 // pred_fallthru
        _
    $region16: #{semckd_loss.1} parent=5 // pred_fallthru
      _
    %p204 = scmp.le.s32.totalorder 1, %s8
    %p205 = scmp.lt.s32.totalorder %s8, 7
    %p206 = pnand %p204, %p205
    %p207 = pneg %p206
    // Predicated region
    $region25: #{semckd_loss.1} parent=5 // pred_check
      _
    $region26: #{semckd_loss.1} parent=5 // pred_check_branch
      %209 = sbr.rel (%p206) target = $region28
    $region27: #{semckd_loss.1} parent=5 // pred_region
      %s210 = ssub.s32 %s8, 1
      %s211 = sadd.s32 %s20, %s24
      %s212 = smul.u32 2, %s23
      %p213 = scmp.lt.s32.totalorder %s21, 1
      %s214 = scalar_select %p213, %s21, 1
      %p215 = scmp.lt.s32.totalorder %s22, 2
      %s216 = scalar_select %p215, %s22, 2
      %p217 = scmp.lt.s32.totalorder %s212, 1
      %s218 = scalar_select %p217, %s212, 1
      %p219 = scmp.lt.s32.totalorder %s211, 0
      %s220 = scalar_select %p219, %s211, 0
      %s221 = sadd.s32 %s220, %s218
      %s222 = smul.addr %s216, 2
      %s223 = sadd.s32 %s221, %s222
      %s224 = smul.addr %s214, 6
      %s225 = sadd.s32 %s223, %s224
      %s226 = smul.addr %s225, 8
      %s227 = scalar_lea.vmem %s0, %s226
      %p228 = pneg %p75
      %p229 = pneg %p72
      %s230 = sadd.s32 %s20, %s24
      %s231 = smul.u32 2, %s23
      %p232 = scmp.lt.s32.totalorder %s21, 1
      %s233 = scalar_select %p232, %s21, 1
      %p234 = scmp.lt.s32.totalorder %s22, 2
      %s235 = scalar_select %p234, %s22, 2
      %p236 = scmp.lt.s32.totalorder %s231, 1
      %s237 = scalar_select %p236, %s231, 1
      %p238 = scmp.lt.s32.totalorder %s230, 0
      %s239 = scalar_select %p238, %s230, 0
      %s240 = sadd.s32 %s239, %s237
      %s241 = smul.addr %s235, 2
      %s242 = sadd.s32 %s240, %s241
      %s243 = smul.addr %s233, 6
      %s244 = sadd.s32 %s242, %s243
      %s245 = smul.addr %s244, 8
      %s246 = scalar_lea.vmem %s1, %s245
      %p247 = pneg %p109
      %p248 = pneg %p106
      %p249 = pneg %p141
      %p250 = pneg %p138
      %p251 = scmp.lt.s32.totalorder %s20, 0
      %s252 = scalar_select %p251, %s20, 0
      %p253 = scmp.lt.s32.totalorder %s21, 1
      %s254 = scalar_select %p253, %s21, 1
      %p255 = scmp.lt.s32.totalorder %s22, 2
      %s256 = scalar_select %p255, %s22, 2
      %p257 = scmp.lt.s32.totalorder %s23, 0
      %s258 = scalar_select %p257, %s23, 0
      %s259 = sadd.s32 %s258, %s256
      %s260 = smul.addr %s254, 3
      %s261 = sadd.s32 %s259, %s260
      %s262 = smul.addr %s252, 6
      %s263 = sadd.s32 %s261, %s262
      %s264 = smul.addr %s263, 2
      %s265 = scalar_lea.vmem %s2, %s264
      %s266 = sadd.s32 %s20, %s24
      %s267 = smul.u32 2, %s23
      %p268 = scmp.lt.s32.totalorder %s21, 1
      %s269 = scalar_select %p268, %s21, 1
      %p270 = scmp.lt.s32.totalorder %s22, 2
      %s271 = scalar_select %p270, %s22, 2
      %p272 = scmp.lt.s32.totalorder %s267, 1
      %s273 = scalar_select %p272, %s267, 1
      %p274 = scmp.lt.s32.totalorder %s266, 0
      %s275 = scalar_select %p274, %s266, 0
      %s276 = sadd.s32 %s275, %s273
      %s277 = smul.addr %s271, 2
      %s278 = sadd.s32 %s276, %s277
      %s279 = smul.addr %s269, 6
      %s280 = sadd.s32 %s278, %s279
      %s281 = smul.addr %s280, 8
      %s282 = scalar_lea.vmem %s0, %s281
      %s283 = sadd.s32 %s20, %s24
      %s284 = smul.u32 2, %s23
      %s285 = sadd.s32 %s20, %s24
      %s286 = smul.u32 2, %s23
      %p287 = scmp.lt.s32.totalorder %s21, 1
      %s288 = scalar_select %p287, %s21, 1
      %p289 = scmp.lt.s32.totalorder %s22, 2
      %s290 = scalar_select %p289, %s22, 2
      %p291 = scmp.lt.s32.totalorder %s286, 1
      %s292 = scalar_select %p291, %s286, 1
      %p293 = scmp.lt.s32.totalorder %s285, 0
      %s294 = scalar_select %p293, %s285, 0
      %s295 = sadd.s32 %s294, %s292
      %s296 = smul.addr %s290, 2
      %s297 = sadd.s32 %s295, %s296
      %s298 = smul.addr %s288, 6
      %s299 = sadd.s32 %s297, %s298
      %s300 = smul.addr %s299, 8
      %s301 = scalar_lea.vmem %s1, %s300
      %s302 = sadd.s32 %s20, %s24
      %s303 = smul.u32 2, %s23
      %p304 = scmp.lt.s32.totalorder %s20, 0
      %s305 = scalar_select %p304, %s20, 0
      %p306 = scmp.lt.s32.totalorder %s21, 1
      %s307 = scalar_select %p306, %s21, 1
      %p308 = scmp.lt.s32.totalorder %s22, 2
      %s309 = scalar_select %p308, %s22, 2
      %p310 = scmp.lt.s32.totalorder %s23, 0
      %s311 = scalar_select %p310, %s23, 0
      %s312 = sadd.s32 %s311, %s309
      %s313 = smul.addr %s307, 3
      %s314 = sadd.s32 %s312, %s313
      %s315 = smul.addr %s305, 6
      %s316 = sadd.s32 %s314, %s315
      %s317 = smul.addr %s316, 2
      %s318 = scalar_lea.vmem %s2, %s317
      %p319 = scmp.eq.s32.totalorder %s24, 0
      // Predicated region
      $region29: #{semckd_loss.1} parent=27 // pred_check
        %p320 = pneg %p319
      $region30: #{semckd_loss.1} parent=27 // pred_check_branch
        %322 = sbr.rel (%p320) target = $region32
      $region31: #{semckd_loss.1} parent=27 // pred_region
        %323 = vst [vmem:[%s318] sm:$0x3] 0.0
      $region32: #{semckd_loss.1} parent=27 // pred_fallthru
        _
      %v324 = vld [vmem:[%s282] sm:$0xff]
      %v325 = vld [vmem:[%s282 + $0x8] sm:$0xff]
      %v326 = vld [vmem:[%s301] sm:$0xff]
      %v327 = vld [vmem:[%s301 + $0x8] sm:$0xff]
      %v328 = vsub.f32 %v324, %v326
      %v329 = vsub.f32 %v325, %v327
      %v330 = vld [vmem:[%s318] sm:$0x3]
      %v331 = vmul.f32 %v328, %v328
      %v332 = vmul.f32 %v329, %v329
      %v333 = vrot.slane %v331, 4
      %v334 = vadd.f32 %v331, %v333
      %v335 = vrot.slane %v334, 2
      %v336 = vadd.f32 %v334, %v335
      %v337 = vrot.slane %v336, 1
      %v338 = vadd.f32 %v336, %v337
      %v339 = vrot.slane %v332, 4
      %v340 = vadd.f32 %v332, %v339
      %v341 = vrot.slane %v340, 2
      %v342 = vadd.f32 %v340, %v341
      %v343 = vrot.slane %v342, 1
      %v344 = vadd.f32 %v342, %v343
      %vm347 = vcmask 1041409
      %v348 = vsel %vm347, %v344, %v338
      %v350 = vadd.f32 %v330, %v348
      %351 = vst [vmem:[%s318] sm:$0x3] %v350
      %p352 = scmp.lt.s32.totalorder %s20, 0
      %s353 = scalar_select %p352, %s20, 0
      %p354 = scmp.lt.s32.totalorder %s21, 1
      %s355 = scalar_select %p354, %s21, 1
      %p356 = scmp.lt.s32.totalorder %s22, 2
      %s357 = scalar_select %p356, %s22, 2
      %p358 = scmp.lt.s32.totalorder %s23, 0
      %s359 = scalar_select %p358, %s23, 0
      %s360 = sadd.s32 %s359, %s357
      %s361 = smul.addr %s355, 3
      %s362 = sadd.s32 %s360, %s361
      %s363 = smul.addr %s353, 6
      %s364 = sadd.s32 %s362, %s363
      %s365 = smul.addr %s364, 2
      %s366 = scalar_lea.vmem %s2, %s365
      // Predicated region
      $region33: #{semckd_loss.1} parent=27 // pred_check
        %p367 = pneg %p138
      $region34: #{semckd_loss.1} parent=27 // pred_check_branch
        %369 = sbr.rel (%p367) target = $region36
      $region35: #{semckd_loss.1} parent=27 // pred_region
        _
      $region36: #{semckd_loss.1} parent=27 // pred_fallthru
        _
    $region28: #{semckd_loss.1} parent=5 // pred_fallthru
      _
    %p370 = scmp.le.s32.totalorder 2, %s8
    // Predicated region
    $region37: #{semckd_loss.1} parent=5 // pred_check
      %p371 = pneg %p370
    $region38: #{semckd_loss.1} parent=5 // pred_check_branch
      %373 = sbr.rel (%p371) target = $region40
    $region39: #{semckd_loss.1} parent=5 // pred_region
      %s374 = ssub.s32 %s8, 2
      // Predicated region
      $region41: #{semckd_loss.1} parent=39 // pred_check
        %p375 = pneg %p144
      $region42: #{semckd_loss.1} parent=39 // pred_check_branch
        %377 = sbr.rel (%p375) target = $region44
      $region43: #{semckd_loss.1} parent=39 // pred_region
        %p378 = scmp.lt.s32.totalorder %s25, 0
        %s379 = scalar_select %p378, %s25, 0
        %p380 = scmp.lt.s32.totalorder %s26, 1
        %s381 = scalar_select %p380, %s26, 1
        %p382 = scmp.lt.s32.totalorder %s27, 2
        %s383 = scalar_select %p382, %s27, 2
        %p384 = scmp.lt.s32.totalorder %s28, 0
        %s385 = scalar_select %p384, %s28, 0
        %s386 = sadd.s32 %s385, %s383
        %s387 = smul.addr %s381, 3
        %s388 = sadd.s32 %s386, %s387
        %s389 = smul.addr %s379, 6
        %s390 = sadd.s32 %s388, %s389
        %s391 = smul.addr %s390, 2
        %s392 = scalar_lea.vmem %s2, %s391
      $region44: #{semckd_loss.1} parent=39 // pred_fallthru
        _
    $region40: #{semckd_loss.1} parent=5 // pred_fallthru
      _
  $region6: #{semckd_loss.1} parent=0 // loop_footer
    %s12 = sadd.s32 1, %s8
  $region7: #{semckd_loss.1} parent=0 // loop_footer_branch
    %7 = sbr.rel target = $region3
  $region8: #{semckd_loss.1} parent=0 // loop_exit
    _

</llo_original>
